<compile_context>
chip_gen: v6e
topology: v6e:2x2x1
jax: 0.10.0
libtpu: 0.0.40
codegen_flags: <defaults>
</compile_context>

<pallas_src>
import functools

import jax
import jax.numpy as jnp
from jax.experimental import pallas as pl
from jax.experimental.pallas import tpu as pltpu

LEAKY_RELU_NEG_SLOPE = 0.01  # torch.nn.LeakyReLU default
LANE = 128                   # vreg lane width
SUBLANE = 8                  # f32 sublane count
MAX_BATCH_TILE = 256         # rows of activations processed per grid step


def _round_up(x, m):
    return ((x + m - 1) // m) * m


# ----------------------------- Pallas kernel ------------------------------ #
def _fused_mlp_kernel(*refs, acts):
    """Fused MLP on one batch tile. refs = (x, w0, b0, w1, b1, ..., out).

    Layers are unrolled at trace time; intermediates stay in vregs/VMEM and
    never touch HBM.
    """
    x_ref = refs[0]
    o_ref = refs[-1]
    wb_refs = refs[1:-1]

    h = x_ref[...]
    for li, act in enumerate(acts):
        w = wb_refs[2 * li][...]
        b = wb_refs[2 * li + 1][...]
        h = jnp.dot(h, w, preferred_element_type=jnp.float32)
        h = h + b  # (TB, Np) + (1, Np) broadcast
        if act:
            h = jnp.where(h >= 0.0, h, LEAKY_RELU_NEG_SLOPE * h)
    o_ref[...] = h.astype(o_ref.dtype)


# --------------------------- parameter handling ---------------------------- #
def build_dense_layer_params(in_features, dims, key, dtype=jnp.float32):
    """Deterministic param init mirroring nn.(Lazy)Linear's U(-1/sqrt(fan_in), +)."""
    # Layer structure exactly as the torch __init__ builds it.
    layer_cfg = []  # list of (out_dim, apply_leaky_relu_after)
    n = len(dims)
    for i in range(n - 1):
        layer_cfg.append((dims[i], i < n - 2))
    layer_cfg.append((dims[-1], False))  # final LazyLinear(dims[-1])

    params = []
    fan_in = in_features
    for out_dim, act in layer_cfg:
        key, kw, kb = jax.random.split(key, 3)
        bound = 1.0 / jnp.sqrt(jnp.array(fan_in, dtype))
        w = jax.random.uniform(kw, (fan_in, out_dim), dtype, -bound, bound)
        b = jax.random.uniform(kb, (1, out_dim), dtype, -bound, bound)
        params.append((w, b, act))
        fan_in = out_dim
    return params


def pad_dense_layer_params(params, in_features):
    """Zero-pad weights/biases so every feature dim is a multiple of 128.

    Zero-padded weight rows/columns and bias entries keep the padded output
    columns exactly 0 (LeakyReLU(0) == 0), so chaining padded layers is exact.
    Done once so the per-call forward only pads the activations.
    """
    padded = []
    acts = []
    fan_in_p = _round_up(in_features, LANE)
    for w, b, act in params:
        kin, nout = w.shape
        n_p = _round_up(nout, LANE)
        w_p = jnp.zeros((fan_in_p, n_p), w.dtype).at[:kin, :nout].set(w)
        b_p = jnp.zeros((1, n_p), b.dtype).at[:, :nout].set(b)
        padded.extend([w_p, b_p])
        acts.append(act)
        fan_in_p = n_p
    out_features = params[-1][0].shape[1]
    return padded, tuple(acts), out_features


# --------------------------- DenseLayer forward ---------------------------- #
@functools.partial(jax.jit, static_argnames=("acts", "out_features"))
def dense_layer_forward(x, padded_params, acts, out_features):
    """Forward pass of DenseLayer (eval mode: Dropout == identity)."""
    # TODO(synk): training-mode Dropout (p=conf.IMITATION_DROPOUT_PROB) not
    # implemented; forward semantics here match eval()/inference.
    B, K = x.shape
    k_p = _round_up(K, LANE)

    # Batch tiling: one grid step per TB rows; weights stay VMEM-resident.
    b_p = max(_round_up(B, SUBLANE), SUBLANE)
    tb = min(b_p, MAX_BATCH_TILE)
    b_p = _round_up(b_p, tb)
    n_blocks = b_p // tb

    x_p = jnp.zeros((b_p, k_p), x.dtype).at[:B, :K].set(x)

    n_final_p = padded_params[-1].shape[-1]  # last bias padded width

    kernel = functools.partial(_fused_mlp_kernel, acts=acts)

    in_specs = [pl.BlockSpec((tb, k_p), lambda i: (i, 0))]
    for p in padded_params:
        # Same block index for every grid step -> stays resident in VMEM.
        in_specs.append(pl.BlockSpec(p.shape, lambda i: (0, 0)))
    out_spec = pl.BlockSpec((tb, n_final_p), lambda i: (i, 0))

    out_p = pl.pallas_call(
        kernel,
        grid=(n_blocks,),
        in_specs=in_specs,
        out_specs=out_spec,
        out_shape=jax.ShapeDtypeStruct((b_p, n_final_p), x.dtype),
        compiler_params=pltpu.CompilerParams(
            dimension_semantics=("parallel",)),
    )(x_p, *padded_params)
    return out_p[:B, :out_features]


def dense_layer_reference(x, params):
    """Pure-JAX reference for correctness checking (unpadded)."""
    for w, b, act in params:
        x = x @ w + b
        if act:
            x = jnp.where(x >= 0.0, x, LEAKY_RELU_NEG_SLOPE * x)
    return x


# --------------------------------- main ------------------------------------ #
if __name__ == "__main__":
    key = jax.random.PRNGKey(0)
    key, kx, kp = jax.random.split(key, 3)

    batch = 2
    in_features = 32
    dims = (64, 32, 8)  # -> Linear(64)+LeakyReLU+Dropout, Linear(32), Linear(8)

    x = jax.random.normal(kx, (batch, in_features), jnp.float32)
    params = build_dense_layer_params(in_features, dims, kp)
    padded_params, acts, out_features = pad_dense_layer_params(params, in_features)

    out = dense_layer_forward(x, tuple(padded_params), acts, out_features)
    out = jax.block_until_ready(out)

    ref = dense_layer_reference(x, params)
    assert out.shape == (batch, dims[-1]), out.shape
    assert jnp.allclose(out, ref, atol=1e-5, rtol=1e-5), "mismatch vs JAX reference"

    print("KERNEL_OK")
</pallas_src>

<mosaic_0001>
module attributes {stable_mosaic.version = 11 : i64} {
  func.func @_fused_mlp_kernel(%arg0: i32, %arg1: memref<8x128xf32, #tpu.memory_space<vmem>>, %arg2: memref<128x128xf32, #tpu.memory_space<vmem>>, %arg3: memref<1x128xf32, #tpu.memory_space<vmem>>, %arg4: memref<128x128xf32, #tpu.memory_space<vmem>>, %arg5: memref<1x128xf32, #tpu.memory_space<vmem>>, %arg6: memref<128x128xf32, #tpu.memory_space<vmem>>, %arg7: memref<1x128xf32, #tpu.memory_space<vmem>>, %arg8: memref<8x128xf32, #tpu.memory_space<vmem>>) attributes {dimension_semantics = [#tpu.dimension_semantics<parallel>], iteration_bounds = array<i64: 1>, scalar_prefetch = 0 : i64, scratch_operands = 0 : i64, tpu.core_type = #tpu.core_type<tc>, window_params = [{transform_indices = @transform_0, window_bounds = array<i64: 8, 128>}, {pipeline_mode = #tpu.pipeline_mode<synchronous>, transform_indices = @transform_1, window_bounds = array<i64: 128, 128>}, {pipeline_mode = #tpu.pipeline_mode<synchronous>, transform_indices = @transform_2, window_bounds = array<i64: 1, 128>}, {pipeline_mode = #tpu.pipeline_mode<synchronous>, transform_indices = @transform_3, window_bounds = array<i64: 128, 128>}, {pipeline_mode = #tpu.pipeline_mode<synchronous>, transform_indices = @transform_4, window_bounds = array<i64: 1, 128>}, {pipeline_mode = #tpu.pipeline_mode<synchronous>, transform_indices = @transform_5, window_bounds = array<i64: 128, 128>}, {pipeline_mode = #tpu.pipeline_mode<synchronous>, transform_indices = @transform_6, window_bounds = array<i64: 1, 128>}, {transform_indices = @transform_7, window_bounds = array<i64: 8, 128>}]} {
    %c0 = arith.constant 0 : index
    %c0_0 = arith.constant 0 : index
    %0 = vector.load %arg1[%c0, %c0_0] : memref<8x128xf32, #tpu.memory_space<vmem>>, vector<8x128xf32>
    %c0_1 = arith.constant 0 : index
    %c0_2 = arith.constant 0 : index
    %1 = vector.load %arg2[%c0_1, %c0_2] : memref<128x128xf32, #tpu.memory_space<vmem>>, vector<128x128xf32>
    %c0_3 = arith.constant 0 : index
    %c0_4 = arith.constant 0 : index
    %2 = vector.load %arg3[%c0_3, %c0_4] : memref<1x128xf32, #tpu.memory_space<vmem>>, vector<1x128xf32>
    %cst = arith.constant dense<0.000000e+00> : vector<8x128xf32>
    %3 = tpu.matmul %0, %1, %cst {dimension_numbers = #tpu.dot_dimension_numbers<[1], [0], [0], [1], [0, 0, 1, 1], [], []>} : vector<8x128xf32>, vector<128x128xf32>, vector<8x128xf32> -> vector<8x128xf32>
    %4 = vector.broadcast %2 : vector<1x128xf32> to vector<8x128xf32>
    %5 = arith.addf %3, %4 : vector<8x128xf32>
    %cst_5 = arith.constant 0.000000e+00 : f32
    %6 = vector.broadcast %cst_5 : f32 to vector<8x128xf32>
    %7 = arith.cmpf oge, %5, %6 : vector<8x128xf32>
    %cst_6 = arith.constant 0.00999999977 : f32
    %8 = vector.broadcast %cst_6 : f32 to vector<8x128xf32>
    %9 = arith.mulf %8, %5 : vector<8x128xf32>
    %10 = arith.select %7, %5, %9 : vector<8x128xi1>, vector<8x128xf32>
    %c0_7 = arith.constant 0 : index
    %c0_8 = arith.constant 0 : index
    %11 = vector.load %arg4[%c0_7, %c0_8] : memref<128x128xf32, #tpu.memory_space<vmem>>, vector<128x128xf32>
    %c0_9 = arith.constant 0 : index
    %c0_10 = arith.constant 0 : index
    %12 = vector.load %arg5[%c0_9, %c0_10] : memref<1x128xf32, #tpu.memory_space<vmem>>, vector<1x128xf32>
    %cst_11 = arith.constant dense<0.000000e+00> : vector<8x128xf32>
    %13 = tpu.matmul %10, %11, %cst_11 {dimension_numbers = #tpu.dot_dimension_numbers<[1], [0], [0], [1], [0, 0, 1, 1], [], []>} : vector<8x128xf32>, vector<128x128xf32>, vector<8x128xf32> -> vector<8x128xf32>
    %14 = vector.broadcast %12 : vector<1x128xf32> to vector<8x128xf32>
    %15 = arith.addf %13, %14 : vector<8x128xf32>
    %c0_12 = arith.constant 0 : index
    %c0_13 = arith.constant 0 : index
    %16 = vector.load %arg6[%c0_12, %c0_13] : memref<128x128xf32, #tpu.memory_space<vmem>>, vector<128x128xf32>
    %c0_14 = arith.constant 0 : index
    %c0_15 = arith.constant 0 : index
    %17 = vector.load %arg7[%c0_14, %c0_15] : memref<1x128xf32, #tpu.memory_space<vmem>>, vector<1x128xf32>
    %cst_16 = arith.constant dense<0.000000e+00> : vector<8x128xf32>
    %18 = tpu.matmul %15, %16, %cst_16 {dimension_numbers = #tpu.dot_dimension_numbers<[1], [0], [0], [1], [0, 0, 1, 1], [], []>} : vector<8x128xf32>, vector<128x128xf32>, vector<8x128xf32> -> vector<8x128xf32>
    %19 = vector.broadcast %17 : vector<1x128xf32> to vector<8x128xf32>
    %20 = arith.addf %18, %19 : vector<8x128xf32>
    %c0_17 = arith.constant 0 : index
    %c0_18 = arith.constant 0 : index
    %21 = vector.load %arg8[%c0_17, %c0_18] : memref<8x128xf32, #tpu.memory_space<vmem>>, vector<8x128xf32>
    tpu.vector_store %arg8[%c0_17, %c0_18], %20 {strides = array<i32>} : memref<8x128xf32, #tpu.memory_space<vmem>>, vector<8x128xf32>,
    return
  }
  func.func @transform_0(%arg0: i32) -> (i32, i32) {
    %c0_i32 = arith.constant 0 : i32
    %c0_i32_0 = arith.constant 0 : i32
    return %arg0, %c0_i32 : i32, i32
  }
  func.func @transform_1(%arg0: i32) -> (i32, i32) {
    %c0_i32 = arith.constant 0 : i32
    %c0_i32_0 = arith.constant 0 : i32
    %c0_i32_1 = arith.constant 0 : i32
    return %c0_i32, %c0_i32_0 : i32, i32
  }
  func.func @transform_2(%arg0: i32) -> (i32, i32) {
    %c0_i32 = arith.constant 0 : i32
    %c0_i32_0 = arith.constant 0 : i32
    %c0_i32_1 = arith.constant 0 : i32
    return %c0_i32, %c0_i32_0 : i32, i32
  }
  func.func @transform_3(%arg0: i32) -> (i32, i32) {
    %c0_i32 = arith.constant 0 : i32
    %c0_i32_0 = arith.constant 0 : i32
    %c0_i32_1 = arith.constant 0 : i32
    return %c0_i32, %c0_i32_0 : i32, i32
  }
  func.func @transform_4(%arg0: i32) -> (i32, i32) {
    %c0_i32 = arith.constant 0 : i32
    %c0_i32_0 = arith.constant 0 : i32
    %c0_i32_1 = arith.constant 0 : i32
    return %c0_i32, %c0_i32_0 : i32, i32
  }
  func.func @transform_5(%arg0: i32) -> (i32, i32) {
    %c0_i32 = arith.constant 0 : i32
    %c0_i32_0 = arith.constant 0 : i32
    %c0_i32_1 = arith.constant 0 : i32
    return %c0_i32, %c0_i32_0 : i32, i32
  }
  func.func @transform_6(%arg0: i32) -> (i32, i32) {
    %c0_i32 = arith.constant 0 : i32
    %c0_i32_0 = arith.constant 0 : i32
    %c0_i32_1 = arith.constant 0 : i32
    return %c0_i32, %c0_i32_0 : i32, i32
  }
  func.func @transform_7(%arg0: i32) -> (i32, i32) {
    %c0_i32 = arith.constant 0 : i32
    %c0_i32_0 = arith.constant 0 : i32
    return %arg0, %c0_i32 : i32, i32
  }
}

</mosaic_0001>

<llo_original>
// kernel: dense_layer_forward.1
$region0: #{dense_layer_forward.1}
  #allocation0 [shape = 'u32[]', space=smem, size = 0x4, offset = 0x4, fixed_abs, tag = 'smem constant byte address 0x4 - core index']
  #allocation1 [shape = 'u32[144,128]{1,0:T(1,128)}', space=vmem, size = 0x12000, scoped, tag = 'internal scratch']
  %s0 = inlined_call_operand.vmem [shape: f32[8,128], index: 0, kind: input, shape index: {}]
  %s1 = inlined_call_operand.hbm [shape: f32[128,128], index: 1, kind: input, shape index: {}]
  %s2 = inlined_call_operand.vmem [shape: f32[1,128], index: 2, kind: input, shape index: {}]
  %s3 = inlined_call_operand.hbm [shape: f32[128,128], index: 3, kind: input, shape index: {}]
  %s4 = inlined_call_operand.vmem [shape: f32[1,128], index: 4, kind: input, shape index: {}]
  %s5 = inlined_call_operand.hbm [shape: f32[128,128], index: 5, kind: input, shape index: {}]
  %s6 = inlined_call_operand.vmem [shape: f32[1,128], index: 6, kind: input, shape index: {}]
  %s7 = inlined_call_operand.vmem [shape: f32[8,128], index: 7, kind: output, shape index: {}]
  %s8 = sld [smem:[#allocation0]]
  $region50: #{dense_layer_forward.1} parent=0
    _
  %s10 = ssub.s32 1, %s8
  %s11 = scalar_select 0, %s10, %s8
  $region1: #{dense_layer_forward.1} parent=0
    #allocation2 [shape = 'u8[65536]{0}', space=vmem, size = 0x10000, scoped, tag = 'input window, operand 1, single buffered']
    #allocation3 [shape = 's32[1]{0}', space=sflag, size = 0x4, scoped, tag = 'scoped memory for dense_layer_forward.1']
    #allocation4 [shape = 'u8[65536]{0}', space=vmem, size = 0x10000, scoped, tag = 'input window, operand 3, single buffered']
    #allocation5 [shape = 's32[1]{0}', space=sflag, size = 0x4, scoped, tag = 'scoped memory for dense_layer_forward.1']
    #allocation6 [shape = 'u8[65536]{0}', space=vmem, size = 0x10000, scoped, tag = 'input window, operand 5, single buffered']
    %12 = vsyncpa [#allocation3], 0
    %13 = vsyncpa [#allocation5], 0
    // Predicated region
    $region2: #{dense_layer_forward.1} parent=1 // pred_check
      _
    $region3: #{dense_layer_forward.1} parent=1 // pred_check_branch
      %15 = sbr.rel (0) target = $region5
    $region4: #{dense_layer_forward.1} parent=1 // pred_region
      _
    $region5: #{dense_layer_forward.1} parent=1 // pred_fallthru
      _
    // Predicated region
    $region6: #{dense_layer_forward.1} parent=1 // pred_check
      _
    $region7: #{dense_layer_forward.1} parent=1 // pred_check_branch
      %17 = sbr.rel (0) target = $region9
    $region8: #{dense_layer_forward.1} parent=1 // pred_region
      %s19 = ssub.s32 2048, 2048
      %20 = vsyncadd [#allocation3], %s19
      %s21 = sshll.u32 [#allocation2], 4
      %s22 = int_to_ptr.vmem [resolvable:$true] %s21
      %27 = dma.hbm_to_vmem [thread:$0]  %s1, 2048, %s22, [#allocation3], 128, 128, 8
    $region9: #{dense_layer_forward.1} parent=1 // pred_fallthru
      _
    // Predicated region
    $region10: #{dense_layer_forward.1} parent=1 // pred_check
      _
    $region11: #{dense_layer_forward.1} parent=1 // pred_check_branch
      %29 = sbr.rel (0) target = $region13
    $region12: #{dense_layer_forward.1} parent=1 // pred_region
      _
    $region13: #{dense_layer_forward.1} parent=1 // pred_fallthru
      _
    // Predicated region
    $region14: #{dense_layer_forward.1} parent=1 // pred_check
      _
    $region15: #{dense_layer_forward.1} parent=1 // pred_check_branch
      %31 = sbr.rel (0) target = $region17
    $region16: #{dense_layer_forward.1} parent=1 // pred_region
      %s33 = ssub.s32 2048, 2048
      %34 = vsyncadd [#allocation5], %s33
      %s35 = sshll.u32 [#allocation4], 4
      %s36 = int_to_ptr.vmem [resolvable:$true] %s35
      %41 = dma.hbm_to_vmem [thread:$0]  %s3, 2048, %s36, [#allocation5], 128, 128, 8
    $region17: #{dense_layer_forward.1} parent=1 // pred_fallthru
      _
    // Predicated region
    $region18: #{dense_layer_forward.1} parent=1 // pred_check
      _
    $region19: #{dense_layer_forward.1} parent=1 // pred_check_branch
      %43 = sbr.rel (0) target = $region21
    $region20: #{dense_layer_forward.1} parent=1 // pred_region
      _
    $region21: #{dense_layer_forward.1} parent=1 // pred_fallthru
      _
    // Predicated region
    $region22: #{dense_layer_forward.1} parent=1 // pred_check
      _
    $region23: #{dense_layer_forward.1} parent=1 // pred_check_branch
      %45 = sbr.rel (0) target = $region25
    $region24: #{dense_layer_forward.1} parent=1 // pred_region
      %s47 = ssub.s32 2048, 2048
      %48 = vsyncadd [#allocation5], %s47
      %s49 = sshll.u32 [#allocation6], 4
      %s50 = int_to_ptr.vmem [resolvable:$true] %s49
      %55 = dma.hbm_to_vmem [thread:$0]  %s5, 2048, %s50, [#allocation5], 128, 128, 8
    $region25: #{dense_layer_forward.1} parent=1 // pred_fallthru
      _
    // Predicated region
    $region26: #{dense_layer_forward.1} parent=1 // pred_check
      _
    $region27: #{dense_layer_forward.1} parent=1 // pred_check_branch
      %57 = sbr.rel (0) target = $region29
    $region28: #{dense_layer_forward.1} parent=1 // pred_region
      _
    $region29: #{dense_layer_forward.1} parent=1 // pred_fallthru
      _
    // Predicated region
    $region30: #{dense_layer_forward.1} parent=1 // pred_check
      _
    $region31: #{dense_layer_forward.1} parent=1 // pred_check_branch
      %59 = sbr.rel (0) target = $region33
    $region32: #{dense_layer_forward.1} parent=1 // pred_region
      %60 = dma.done [#allocation3], 2048
    $region33: #{dense_layer_forward.1} parent=1 // pred_fallthru
      _
    // Predicated region
    $region34: #{dense_layer_forward.1} parent=1 // pred_check
      _
    $region35: #{dense_layer_forward.1} parent=1 // pred_check_branch
      %62 = sbr.rel (0) target = $region37
    $region36: #{dense_layer_forward.1} parent=1 // pred_region
      %63 = dma.done [#allocation5], 2048
    $region37: #{dense_layer_forward.1} parent=1 // pred_fallthru
      _
    // Predicated region
    $region38: #{dense_layer_forward.1} parent=1 // pred_check
      _
    $region39: #{dense_layer_forward.1} parent=1 // pred_check_branch
      %65 = sbr.rel (0) target = $region41
    $region40: #{dense_layer_forward.1} parent=1 // pred_region
      %66 = dma.done [#allocation5], 2048
    $region41: #{dense_layer_forward.1} parent=1 // pred_fallthru
      _
    %v67 = vld [vmem:[%s0] sm:$0xff]
    %v68 = vld [vmem:[#allocation2] sm:$0xff]
    %v69 = vld [vmem:[#allocation2 + $0x8] sm:$0xff]
    %v70 = vld [vmem:[#allocation2 + $0x10] sm:$0xff]
    %v71 = vld [vmem:[#allocation2 + $0x18] sm:$0xff]
    %v72 = vld [vmem:[#allocation2 + $0x20] sm:$0xff]
    %v73 = vld [vmem:[#allocation2 + $0x28] sm:$0xff]
    %v74 = vld [vmem:[#allocation2 + $0x30] sm:$0xff]
    %v75 = vld [vmem:[#allocation2 + $0x38] sm:$0xff]
    %v76 = vld [vmem:[#allocation2 + $0x40] sm:$0xff]
    %v77 = vld [vmem:[#allocation2 + $0x48] sm:$0xff]
    %v78 = vld [vmem:[#allocation2 + $0x50] sm:$0xff]
    %v79 = vld [vmem:[#allocation2 + $0x58] sm:$0xff]
    %v80 = vld [vmem:[#allocation2 + $0x60] sm:$0xff]
    %v81 = vld [vmem:[#allocation2 + $0x68] sm:$0xff]
    %v82 = vld [vmem:[#allocation2 + $0x70] sm:$0xff]
    %v83 = vld [vmem:[#allocation2 + $0x78] sm:$0xff]
    %v84 = vld [vmem:[%s2] sm:$0x1]
    %v86 = vlaneseq
    %v87 = vshrl.u32 %v86, 7
    %v88 = vsub.s32 0, %v87
    %v89 = vrot.slane %v84, %v88
    %91 = vmatprep.subr.mxu0 0.0
    %92 = vmatpush1.msra.mxu0 %v83
    %93 = vmatprep.subr.mxu0 0.0
    %94 = vmatpush1.msra.mxu0 %v82
    %95 = vmatprep.subr.mxu0 0.0
    %96 = vmatpush1.msra.mxu0 %v81
    %97 = vmatprep.subr.mxu0 0.0
    %98 = vmatpush1.msra.mxu0 %v80
    %99 = vmatprep.subr.mxu0 0.0
    %100 = vmatpush1.msra.mxu0 %v79
    %101 = vmatprep.subr.mxu0 0.0
    %102 = vmatpush1.msra.mxu0 %v78
    %103 = vmatprep.subr.mxu0 0.0
    %104 = vmatpush1.msra.mxu0 %v77
    %105 = vmatprep.subr.mxu0 0.0
    %106 = vmatpush1.msra.mxu0 %v76
    %107 = vmatprep.subr.mxu0 0.0
    %108 = vmatpush1.msra.mxu0 %v75
    %109 = vmatprep.subr.mxu0 0.0
    %110 = vmatpush1.msra.mxu0 %v74
    %111 = vmatprep.subr.mxu0 0.0
    %112 = vmatpush1.msra.mxu0 %v73
    %113 = vmatprep.subr.mxu0 0.0
    %114 = vmatpush1.msra.mxu0 %v72
    %115 = vmatprep.subr.mxu0 0.0
    %116 = vmatpush1.msra.mxu0 %v71
    %117 = vmatprep.subr.mxu0 0.0
    %118 = vmatpush1.msra.mxu0 %v70
    %119 = vmatprep.subr.mxu0 0.0
    %120 = vmatpush1.msra.mxu0 %v69
    %121 = vmatprep.subr.mxu0 0.0
    %122 = vmatpush1.msra.mxu0 %v68
    %123 = vmatprep.subr.mxu0 0.0
    %124 = vmatpush2.msra.mxu0 0.0
    %125 = vmatprep.subr.mxu0 0.0
    %126 = vmatpush2.msra.mxu0 0.0
    %127 = vmatprep.subr.mxu0 0.0
    %128 = vmatpush2.msra.mxu0 0.0
    %129 = vmatprep.subr.mxu0 0.0
    %130 = vmatpush2.msra.mxu0 0.0
    %131 = vmatprep.subr.mxu0 0.0
    %132 = vmatpush2.msra.mxu0 0.0
    %133 = vmatprep.subr.mxu0 0.0
    %134 = vmatpush2.msra.mxu0 0.0
    %135 = vmatprep.subr.mxu0 0.0
    %136 = vmatpush2.msra.mxu0 0.0
    %137 = vmatprep.subr.mxu0 0.0
    %138 = vmatpush2.msra.mxu0 0.0
    %139 = vmatprep.subr.mxu0 0.0
    %140 = vmatpush2.msra.mxu0 0.0
    %141 = vmatprep.subr.mxu0 0.0
    %142 = vmatpush2.msra.mxu0 0.0
    %143 = vmatprep.subr.mxu0 0.0
    %144 = vmatpush2.msra.mxu0 0.0
    %145 = vmatprep.subr.mxu0 0.0
    %146 = vmatpush2.msra.mxu0 0.0
    %147 = vmatprep.subr.mxu0 0.0
    %148 = vmatpush2.msra.mxu0 0.0
    %149 = vmatprep.subr.mxu0 0.0
    %150 = vmatpush2.msra.mxu0 0.0
    %151 = vmatprep.subr.mxu0 0.0
    %152 = vmatpush2.msra.mxu0 0.0
    %153 = vmatprep.subr.mxu0 0.0
    %154 = vmatpush2.msra.mxu0 0.0
    %155 = vmatprep.mubr.f32.mxu0 0.0
    %156 = vmatmul.mubr.f32.gmra.mxu0 %v67
    %v157 = vpop.f32.mrf.mxu0
    %v158 = vadd.f32 %v89, %v157
    %v159 = vpop.f32.mrf.mxu0
    %160 = vdwg.mxu0
    %vm161 = vcmp.ge.f32.partialorder %v158, 0.0
    %v162 = vmul.f32 %v158, 0.01
    %v163 = vsel %vm161, %v158, %v162
    %v164 = vld [vmem:[#allocation4] sm:$0xff]
    %v165 = vld [vmem:[#allocation4 + $0x8] sm:$0xff]
    %v166 = vld [vmem:[#allocation4 + $0x10] sm:$0xff]
    %v167 = vld [vmem:[#allocation4 + $0x18] sm:$0xff]
    %v168 = vld [vmem:[#allocation4 + $0x20] sm:$0xff]
    %v169 = vld [vmem:[#allocation4 + $0x28] sm:$0xff]
    %v170 = vld [vmem:[#allocation4 + $0x30] sm:$0xff]
    %v171 = vld [vmem:[#allocation4 + $0x38] sm:$0xff]
    %v172 = vld [vmem:[#allocation4 + $0x40] sm:$0xff]
    %v173 = vld [vmem:[#allocation4 + $0x48] sm:$0xff]
    %v174 = vld [vmem:[#allocation4 + $0x50] sm:$0xff]
    %v175 = vld [vmem:[#allocation4 + $0x58] sm:$0xff]
    %v176 = vld [vmem:[#allocation4 + $0x60] sm:$0xff]
    %v177 = vld [vmem:[#allocation4 + $0x68] sm:$0xff]
    %v178 = vld [vmem:[#allocation4 + $0x70] sm:$0xff]
    %v179 = vld [vmem:[#allocation4 + $0x78] sm:$0xff]
    %v180 = vld [vmem:[%s4] sm:$0x1]
    %v182 = vlaneseq
    %v183 = vshrl.u32 %v182, 7
    %v184 = vsub.s32 0, %v183
    %v185 = vrot.slane %v180, %v184
    %187 = vmatprep.subr.mxu0 0.0
    %188 = vmatpush1.msra.mxu0 %v179
    %189 = vmatprep.subr.mxu0 0.0
    %190 = vmatpush1.msra.mxu0 %v178
    %191 = vmatprep.subr.mxu0 0.0
    %192 = vmatpush1.msra.mxu0 %v177
    %193 = vmatprep.subr.mxu0 0.0
    %194 = vmatpush1.msra.mxu0 %v176
    %195 = vmatprep.subr.mxu0 0.0
    %196 = vmatpush1.msra.mxu0 %v175
    %197 = vmatprep.subr.mxu0 0.0
    %198 = vmatpush1.msra.mxu0 %v174
    %199 = vmatprep.subr.mxu0 0.0
    %200 = vmatpush1.msra.mxu0 %v173
    %201 = vmatprep.subr.mxu0 0.0
    %202 = vmatpush1.msra.mxu0 %v172
    %203 = vmatprep.subr.mxu0 0.0
    %204 = vmatpush1.msra.mxu0 %v171
    %205 = vmatprep.subr.mxu0 0.0
    %206 = vmatpush1.msra.mxu0 %v170
    %207 = vmatprep.subr.mxu0 0.0
    %208 = vmatpush1.msra.mxu0 %v169
    %209 = vmatprep.subr.mxu0 0.0
    %210 = vmatpush1.msra.mxu0 %v168
    %211 = vmatprep.subr.mxu0 0.0
    %212 = vmatpush1.msra.mxu0 %v167
    %213 = vmatprep.subr.mxu0 0.0
    %214 = vmatpush1.msra.mxu0 %v166
    %215 = vmatprep.subr.mxu0 0.0
    %216 = vmatpush1.msra.mxu0 %v165
    %217 = vmatprep.subr.mxu0 0.0
    %218 = vmatpush1.msra.mxu0 %v164
    %219 = vmatprep.subr.mxu0 0.0
    %220 = vmatpush2.msra.mxu0 0.0
    %221 = vmatprep.subr.mxu0 0.0
    %222 = vmatpush2.msra.mxu0 0.0
    %223 = vmatprep.subr.mxu0 0.0
    %224 = vmatpush2.msra.mxu0 0.0
    %225 = vmatprep.subr.mxu0 0.0
    %226 = vmatpush2.msra.mxu0 0.0
    %227 = vmatprep.subr.mxu0 0.0
    %228 = vmatpush2.msra.mxu0 0.0
    %229 = vmatprep.subr.mxu0 0.0
    %230 = vmatpush2.msra.mxu0 0.0
    %231 = vmatprep.subr.mxu0 0.0
    %232 = vmatpush2.msra.mxu0 0.0
    %233 = vmatprep.subr.mxu0 0.0
    %234 = vmatpush2.msra.mxu0 0.0
    %235 = vmatprep.subr.mxu0 0.0
    %236 = vmatpush2.msra.mxu0 0.0
    %237 = vmatprep.subr.mxu0 0.0
    %238 = vmatpush2.msra.mxu0 0.0
    %239 = vmatprep.subr.mxu0 0.0
    %240 = vmatpush2.msra.mxu0 0.0
    %241 = vmatprep.subr.mxu0 0.0
    %242 = vmatpush2.msra.mxu0 0.0
    %243 = vmatprep.subr.mxu0 0.0
    %244 = vmatpush2.msra.mxu0 0.0
    %245 = vmatprep.subr.mxu0 0.0
    %246 = vmatpush2.msra.mxu0 0.0
    %247 = vmatprep.subr.mxu0 0.0
    %248 = vmatpush2.msra.mxu0 0.0
    %249 = vmatprep.subr.mxu0 0.0
    %250 = vmatpush2.msra.mxu0 0.0
    %251 = vmatprep.mubr.f32.mxu0 0.0
    %252 = vmatmul.mubr.f32.gmra.mxu0 %v163
    %v253 = vpop.f32.mrf.mxu0
    %v254 = vadd.f32 %v185, %v253
    %v255 = vpop.f32.mrf.mxu0
    %256 = vdwg.mxu0
    %v257 = vld [vmem:[#allocation6] sm:$0xff]
    %v258 = vld [vmem:[#allocation6 + $0x8] sm:$0xff]
    %v259 = vld [vmem:[#allocation6 + $0x10] sm:$0xff]
    %v260 = vld [vmem:[#allocation6 + $0x18] sm:$0xff]
    %v261 = vld [vmem:[#allocation6 + $0x20] sm:$0xff]
    %v262 = vld [vmem:[#allocation6 + $0x28] sm:$0xff]
    %v263 = vld [vmem:[#allocation6 + $0x30] sm:$0xff]
    %v264 = vld [vmem:[#allocation6 + $0x38] sm:$0xff]
    %v265 = vld [vmem:[#allocation6 + $0x40] sm:$0xff]
    %v266 = vld [vmem:[#allocation6 + $0x48] sm:$0xff]
    %v267 = vld [vmem:[#allocation6 + $0x50] sm:$0xff]
    %v268 = vld [vmem:[#allocation6 + $0x58] sm:$0xff]
    %v269 = vld [vmem:[#allocation6 + $0x60] sm:$0xff]
    %v270 = vld [vmem:[#allocation6 + $0x68] sm:$0xff]
    %v271 = vld [vmem:[#allocation6 + $0x70] sm:$0xff]
    %v272 = vld [vmem:[#allocation6 + $0x78] sm:$0xff]
    %v273 = vld [vmem:[%s6] sm:$0x1]
    %v275 = vlaneseq
    %v276 = vshrl.u32 %v275, 7
    %v277 = vsub.s32 0, %v276
    %v278 = vrot.slane %v273, %v277
    %280 = vmatprep.subr.mxu0 0.0
    %281 = vmatpush1.msra.mxu0 %v272
    %282 = vmatprep.subr.mxu0 0.0
    %283 = vmatpush1.msra.mxu0 %v271
    %284 = vmatprep.subr.mxu0 0.0
    %285 = vmatpush1.msra.mxu0 %v270
    %286 = vmatprep.subr.mxu0 0.0
    %287 = vmatpush1.msra.mxu0 %v269
    %288 = vmatprep.subr.mxu0 0.0
    %289 = vmatpush1.msra.mxu0 %v268
    %290 = vmatprep.subr.mxu0 0.0
    %291 = vmatpush1.msra.mxu0 %v267
    %292 = vmatprep.subr.mxu0 0.0
    %293 = vmatpush1.msra.mxu0 %v266
    %294 = vmatprep.subr.mxu0 0.0
    %295 = vmatpush1.msra.mxu0 %v265
    %296 = vmatprep.subr.mxu0 0.0
    %297 = vmatpush1.msra.mxu0 %v264
    %298 = vmatprep.subr.mxu0 0.0
    %299 = vmatpush1.msra.mxu0 %v263
    %300 = vmatprep.subr.mxu0 0.0
    %301 = vmatpush1.msra.mxu0 %v262
    %302 = vmatprep.subr.mxu0 0.0
    %303 = vmatpush1.msra.mxu0 %v261
    %304 = vmatprep.subr.mxu0 0.0
    %305 = vmatpush1.msra.mxu0 %v260
    %306 = vmatprep.subr.mxu0 0.0
    %307 = vmatpush1.msra.mxu0 %v259
    %308 = vmatprep.subr.mxu0 0.0
    %309 = vmatpush1.msra.mxu0 %v258
    %310 = vmatprep.subr.mxu0 0.0
    %311 = vmatpush1.msra.mxu0 %v257
    %312 = vmatprep.subr.mxu0 0.0
    %313 = vmatpush2.msra.mxu0 0.0
    %314 = vmatprep.subr.mxu0 0.0
    %315 = vmatpush2.msra.mxu0 0.0
    %316 = vmatprep.subr.mxu0 0.0
    %317 = vmatpush2.msra.mxu0 0.0
    %318 = vmatprep.subr.mxu0 0.0
    %319 = vmatpush2.msra.mxu0 0.0
    %320 = vmatprep.subr.mxu0 0.0
    %321 = vmatpush2.msra.mxu0 0.0
    %322 = vmatprep.subr.mxu0 0.0
    %323 = vmatpush2.msra.mxu0 0.0
    %324 = vmatprep.subr.mxu0 0.0
    %325 = vmatpush2.msra.mxu0 0.0
    %326 = vmatprep.subr.mxu0 0.0
    %327 = vmatpush2.msra.mxu0 0.0
    %328 = vmatprep.subr.mxu0 0.0
    %329 = vmatpush2.msra.mxu0 0.0
    %330 = vmatprep.subr.mxu0 0.0
    %331 = vmatpush2.msra.mxu0 0.0
    %332 = vmatprep.subr.mxu0 0.0
    %333 = vmatpush2.msra.mxu0 0.0
    %334 = vmatprep.subr.mxu0 0.0
    %335 = vmatpush2.msra.mxu0 0.0
    %336 = vmatprep.subr.mxu0 0.0
    %337 = vmatpush2.msra.mxu0 0.0
    %338 = vmatprep.subr.mxu0 0.0
    %339 = vmatpush2.msra.mxu0 0.0
    %340 = vmatprep.subr.mxu0 0.0
    %341 = vmatpush2.msra.mxu0 0.0
    %342 = vmatprep.subr.mxu0 0.0
    %343 = vmatpush2.msra.mxu0 0.0
    %344 = vmatprep.mubr.f32.mxu0 0.0
    %345 = vmatmul.mubr.f32.gmra.mxu0 %v254
    %v346 = vpop.f32.mrf.mxu0
    %v347 = vadd.f32 %v278, %v346
    %v348 = vpop.f32.mrf.mxu0
    %349 = vdwg.mxu0
    %350 = vst [vmem:[%s7] sm:$0xff] %v347
    // Predicated region
    $region42: #{dense_layer_forward.1} parent=1 // pred_check
      _
    $region43: #{dense_layer_forward.1} parent=1 // pred_check_branch
      %352 = sbr.rel (0) target = $region45
    $region44: #{dense_layer_forward.1} parent=1 // pred_region
      _
    $region45: #{dense_layer_forward.1} parent=1 // pred_fallthru
      _
    // Predicated region
    $region46: #{dense_layer_forward.1} parent=1 // pred_check
      _
    $region47: #{dense_layer_forward.1} parent=1 // pred_check_branch
      %354 = sbr.rel (0) target = $region49
    $region48: #{dense_layer_forward.1} parent=1 // pred_region
      _
    $region49: #{dense_layer_forward.1} parent=1 // pred_fallthru
      _
    %355 = vsyncpa [#allocation3], 1
    %356 = vsyncpa [#allocation5], 1

</llo_original>
